<compile_context>
chip_gen: v6e
topology: v6e:2x2x1
jax: 0.10.0
libtpu: 0.0.40
codegen_flags: <defaults>
</compile_context>

<pallas_src>
import jax
import jax.numpy as jnp
from jax.experimental import pallas as pl
from jax.experimental.pallas import tpu as pltpu


def func_kernel(x_ref, w_ref, p_ref, o_ref):
    # --- Dropout(None) / Identity: no-op ---
    # Cast the activation tile to the matmul dtype (bf16) in-vreg; W arrives
    # already cast, so both MXU operands are bf16 while accumulation is f32.
    x = x_ref[...].astype(w_ref.dtype)

    # --- func_layer: Linear(H, H)  (x @ W + b), MXU matmul, f32 accumulate ---
    y = jnp.dot(x, w_ref[...], preferred_element_type=jnp.float32)
    y = y + p_ref[0:1, :]                     # bias (row 0 of packed params)

    # --- norm_layer: LayerNorm over last dim (eps = 1e-5, PyTorch default) ---
    # Two-pass statistics: mean, then centered sum of squares. The second
    # XLU reduction is free under the HBM-bound roofline and avoids the
    # E[y^2] - mean^2 cancellation of the one-pass form.
    mean = jnp.mean(y, axis=-1, keepdims=True)
    yc = y - mean
    var = jnp.mean(yc * yc, axis=-1, keepdims=True)
    yn = yc * jax.lax.rsqrt(var + 1e-5)
    yn = yn * p_ref[1:2, :] + p_ref[2:3, :]   # gamma (row 1), beta (row 2)

    # --- activation: ReLU ---
    o_ref[...] = jnp.maximum(yn, 0.0).astype(o_ref.dtype)


def _vmem_budget():
    """Per-generation VMEM budget (~75% of physical per-core capacity):
    ~48 MiB on v7x (64 MiB/TC), ~96 MiB on v5e/v6e (128 MiB)."""
    try:
        cap = pltpu.get_tpu_info().vmem_capacity_bytes
    except Exception:  # conservative (v7x-sized) fallback if query unavailable
        cap = 64 * 1024 * 1024
    return (cap * 3) // 4


def _pick_block_rows(n, h, x_bytes, out_bytes, w_bytes, budget):
    """Largest row tile fitting the budget. 256-multiples first (256-wide MXU
    on v6e/v7x); 128-multiples are already optimal on v5e's 128-wide MXU; 8 is
    the sublane floor. TM is capped so the grid keeps >=2 steps (>=4 for large
    N) so the 'parallel' axis can shard across v7x's two TensorCores."""
    candidates = (1024, 768, 512, 384, 256, 128, 64, 32, 16, 8)
    if n <= 8:
        return 8
    cap = n // 4 if n >= 4 * 256 else n // 2
    cap = max(8, cap)
    headroom = 2 << 20
    for tm in candidates:
        if tm > cap:
            continue
        # double-buffered x/out tiles + single-buffered resident W + params
        est = 2 * tm * h * (x_bytes + out_bytes) + w_bytes + 8 * h * 4
        if est + headroom <= budget:
            return tm
    return 8


def func_forward(x, weight, bias, gamma, beta, *,
                 matmul_dtype=jnp.bfloat16, out_dtype=None, block_rows=None):
    """x: (B, S, H) float32 or bfloat16. weight: (H, H) laid out as (in, out).
    out_dtype: emit bf16 when the consumer accepts it to cut HBM writeback."""
    B, S, H = x.shape
    N = B * S
    out_dtype = x.dtype if out_dtype is None else out_dtype
    x2d = x.reshape(N, H)

    # One-time wrapper cast of W: halves its HBM->VMEM DMA and resident VMEM
    # footprint (reused by every row tile). Post-matmul params stay f32,
    # packed into a single (8, H) operand: row 0 bias, row 1 gamma, row 2 beta.
    w = weight.astype(matmul_dtype)
    params = jnp.zeros((8, H), jnp.float32)
    params = params.at[0].set(bias.astype(jnp.float32))
    params = params.at[1].set(gamma.astype(jnp.float32))
    params = params.at[2].set(beta.astype(jnp.float32))

    x_bytes = x2d.dtype.itemsize
    out_bytes = jnp.dtype(out_dtype).itemsize
    w_bytes = H * H * jnp.dtype(matmul_dtype).itemsize
    budget = _vmem_budget()
    tm = block_rows if block_rows is not None else _pick_block_rows(
        N, H, x_bytes, out_bytes, w_bytes, budget)
    grid = (pl.cdiv(N, tm),)  # ragged last tile is fine: rows are independent

    # VMEM estimate: double-buffered x/out tiles + single-buffered resident W
    # + packed params + headroom. The limit is never clamped below `est`.
    est = (2 * tm * H * x_bytes + 2 * tm * H * out_bytes
           + w_bytes + 8 * H * 4 + (2 << 20))
    vmem_limit = int(max(est, min(budget, 32 * 1024 * 1024)))

    def _call(single_buffer_resident):
        def resident(shape):
            # Constant index_map -> fetched once; one buffer is enough.
            if single_buffer_resident:
                return pl.BlockSpec(shape, lambda i: (0, 0),
                                    pipeline_mode=pl.Buffered(1))
            return pl.BlockSpec(shape, lambda i: (0, 0))

        return pl.pallas_call(
            func_kernel,
            out_shape=jax.ShapeDtypeStruct((N, H), out_dtype),
            grid_spec=pl.GridSpec(
                grid=grid,
                in_specs=[
                    pl.BlockSpec((tm, H), lambda i: (i, 0)),  # x: row-tiled
                    resident((H, H)),                         # W (in, out)
                    resident((8, H)),                         # bias/gamma/beta
                ],
                out_specs=pl.BlockSpec((tm, H), lambda i: (i, 0)),
            ),
            compiler_params=pltpu.CompilerParams(
                dimension_semantics=("parallel",),
                vmem_limit_bytes=vmem_limit,
            ),
        )(x2d, w, params)

    try:
        out2d = _call(True)
    except Exception:
        # Fallback for jax versions that reject Buffered(1) on resident
        # operands: identical kernel, default double-buffering.
        out2d = _call(False)

    return out2d.reshape(B, S, H)


if __name__ == "__main__":
    # Small but lane-dense shapes: H multiple of 128 keeps vregs / stores full.
    B, S, H = 2, 8, 128

    key = jax.random.PRNGKey(0)
    kx, kw, kb = jax.random.split(key, 3)

    x = jax.random.normal(kx, (B, S, H), dtype=jnp.float32)

    # Deterministic parameter init (synthetic, not a checkpoint load).
    # nn.Linear(H, H): weight (out, in) ~ U(-1/sqrt(H), 1/sqrt(H)); stored
    # pre-transposed as (in, out) for the kernel.
    bound = 1.0 / jnp.sqrt(jnp.float32(H))
    w_out_in = jax.random.uniform(kw, (H, H), jnp.float32, -bound, bound)
    weight = w_out_in.T  # (in, out)
    bias = jax.random.uniform(kb, (H,), jnp.float32, -bound, bound)
    # nn.LayerNorm(H) default init: gamma = 1, beta = 0.
    gamma = jnp.ones((H,), jnp.float32)
    beta = jnp.zeros((H,), jnp.float32)

    out = func_forward(x, weight, bias, gamma, beta)
    jax.block_until_ready(out)

    # Reference in plain JAX, mirroring the kernel's bf16 matmul operands
    # (f32 accumulation + f32 LayerNorm), same semantics as the module forward.
    xr = x.reshape(-1, H).astype(jnp.bfloat16)
    wr = weight.astype(jnp.bfloat16)
    y_ref = jnp.dot(xr, wr, preferred_element_type=jnp.float32) + bias
    mean = y_ref.mean(-1, keepdims=True)
    var = ((y_ref - mean) ** 2).mean(-1, keepdims=True)
    y_ref = (y_ref - mean) / jnp.sqrt(var + 1e-5) * gamma + beta
    y_ref = jnp.maximum(y_ref, 0.0).reshape(B, S, H)
    assert jnp.allclose(out, y_ref, atol=1e-4, rtol=1e-4), "mismatch vs reference"

    print("KERNEL_OK")
</pallas_src>

<mosaic_0001>
module attributes {stable_mosaic.version = 11 : i64} {
  func.func @func_kernel(%arg0: i32, %arg1: memref<8x128xf32, #tpu.memory_space<vmem>>, %arg2: memref<128x128xbf16, #tpu.memory_space<vmem>>, %arg3: memref<8x128xf32, #tpu.memory_space<vmem>>, %arg4: memref<8x128xf32, #tpu.memory_space<vmem>>) attributes {dimension_semantics = [#tpu.dimension_semantics<parallel>], iteration_bounds = array<i64: 2>, scalar_prefetch = 0 : i64, scratch_operands = 0 : i64, tpu.core_type = #tpu.core_type<tc>, window_params = [{transform_indices = @transform_0, window_bounds = array<i64: 8, 128>}, {pipeline_mode = #tpu.pipeline_mode<synchronous>, transform_indices = @transform_1, window_bounds = array<i64: 128, 128>}, {pipeline_mode = #tpu.pipeline_mode<synchronous>, transform_indices = @transform_2, window_bounds = array<i64: 8, 128>}, {transform_indices = @transform_3, window_bounds = array<i64: 8, 128>}]} {
    %c0 = arith.constant 0 : index
    %c0_0 = arith.constant 0 : index
    %0 = vector.load %arg1[%c0, %c0_0] : memref<8x128xf32, #tpu.memory_space<vmem>>, vector<8x128xf32>
    %1 = arith.truncf %0 : vector<8x128xf32> to vector<8x128xbf16>
    %c0_1 = arith.constant 0 : index
    %c0_2 = arith.constant 0 : index
    %2 = vector.load %arg2[%c0_1, %c0_2] : memref<128x128xbf16, #tpu.memory_space<vmem>>, vector<128x128xbf16>
    %cst = arith.constant dense<0.000000e+00> : vector<8x128xf32>
    %3 = tpu.matmul %1, %2, %cst {dimension_numbers = #tpu.dot_dimension_numbers<[1], [0], [0], [1], [0, 0, 1, 1], [], []>} : vector<8x128xbf16>, vector<128x128xbf16>, vector<8x128xf32> -> vector<8x128xf32>
    %c0_3 = arith.constant 0 : index
    %c0_4 = arith.constant 0 : index
    %4 = vector.load %arg3[%c0_3, %c0_4] : memref<8x128xf32, #tpu.memory_space<vmem>>, vector<1x128xf32>
    %5 = vector.broadcast %4 : vector<1x128xf32> to vector<8x128xf32>
    %6 = arith.addf %3, %5 : vector<8x128xf32>
    %cst_5 = arith.constant dense<0.000000e+00> : vector<8xf32>
    %7 = vector.multi_reduction <add>, %6, %cst_5 [1] : vector<8x128xf32> to vector<8xf32>
    %8 = vector.shape_cast %7 : vector<8xf32> to vector<8x1xf32>
    %cst_6 = arith.constant 1.280000e+02 : f32
    %9 = vector.broadcast %cst_6 : f32 to vector<8x1xf32>
    %10 = arith.divf %8, %9 : vector<8x1xf32>
    %11 = vector.broadcast %10 : vector<8x1xf32> to vector<8x128xf32>
    %12 = arith.subf %6, %11 : vector<8x128xf32>
    %13 = arith.mulf %12, %12 : vector<8x128xf32>
    %cst_7 = arith.constant dense<0.000000e+00> : vector<8xf32>
    %14 = vector.multi_reduction <add>, %13, %cst_7 [1] : vector<8x128xf32> to vector<8xf32>
    %15 = vector.shape_cast %14 : vector<8xf32> to vector<8x1xf32>
    %cst_8 = arith.constant 1.280000e+02 : f32
    %16 = vector.broadcast %cst_8 : f32 to vector<8x1xf32>
    %17 = arith.divf %15, %16 : vector<8x1xf32>
    %cst_9 = arith.constant 9.99999974E-6 : f32
    %18 = vector.broadcast %cst_9 : f32 to vector<8x1xf32>
    %19 = arith.addf %17, %18 : vector<8x1xf32>
    %20 = math.rsqrt %19 : vector<8x1xf32>
    %21 = vector.broadcast %20 : vector<8x1xf32> to vector<8x128xf32>
    %22 = arith.mulf %12, %21 : vector<8x128xf32>
    %c1 = arith.constant 1 : index
    %c0_10 = arith.constant 0 : index
    %23 = vector.load %arg3[%c1, %c0_10] : memref<8x128xf32, #tpu.memory_space<vmem>>, vector<1x128xf32>
    %24 = vector.broadcast %23 : vector<1x128xf32> to vector<8x128xf32>
    %25 = arith.mulf %22, %24 : vector<8x128xf32>
    %c2 = arith.constant 2 : index
    %c0_11 = arith.constant 0 : index
    %26 = vector.load %arg3[%c2, %c0_11] : memref<8x128xf32, #tpu.memory_space<vmem>>, vector<1x128xf32>
    %27 = vector.broadcast %26 : vector<1x128xf32> to vector<8x128xf32>
    %28 = arith.addf %25, %27 : vector<8x128xf32>
    %cst_12 = arith.constant 0.000000e+00 : f32
    %29 = vector.broadcast %cst_12 : f32 to vector<8x128xf32>
    %30 = arith.maximumf %28, %29 : vector<8x128xf32>
    %c0_13 = arith.constant 0 : index
    %c0_14 = arith.constant 0 : index
    %31 = vector.load %arg4[%c0_13, %c0_14] : memref<8x128xf32, #tpu.memory_space<vmem>>, vector<8x128xf32>
    tpu.vector_store %arg4[%c0_13, %c0_14], %30 {strides = array<i32>} : memref<8x128xf32, #tpu.memory_space<vmem>>, vector<8x128xf32>,
    return
  }
  func.func @transform_0(%arg0: i32) -> (i32, i32) {
    %c0_i32 = arith.constant 0 : i32
    %c0_i32_0 = arith.constant 0 : i32
    return %arg0, %c0_i32 : i32, i32
  }
  func.func @transform_1(%arg0: i32) -> (i32, i32) {
    %c0_i32 = arith.constant 0 : i32
    %c0_i32_0 = arith.constant 0 : i32
    %c0_i32_1 = arith.constant 0 : i32
    return %c0_i32, %c0_i32_0 : i32, i32
  }
  func.func @transform_2(%arg0: i32) -> (i32, i32) {
    %c0_i32 = arith.constant 0 : i32
    %c0_i32_0 = arith.constant 0 : i32
    %c0_i32_1 = arith.constant 0 : i32
    return %c0_i32, %c0_i32_0 : i32, i32
  }
  func.func @transform_3(%arg0: i32) -> (i32, i32) {
    %c0_i32 = arith.constant 0 : i32
    %c0_i32_0 = arith.constant 0 : i32
    return %arg0, %c0_i32 : i32, i32
  }
}

module attributes {stable_mosaic.version = 11 : i64} {
  func.func @func_kernel(%arg0: i32, %arg1: memref<8x128xf32, #tpu.memory_space<vmem>>, %arg2: memref<128x128xbf16, #tpu.memory_space<vmem>>, %arg3: memref<8x128xf32, #tpu.memory_space<vmem>>, %arg4: memref<8x128xf32, #tpu.memory_space<vmem>>) attributes {dimension_semantics = [#tpu.dimension_semantics<parallel>], iteration_bounds = array<i64: 2>, scalar_prefetch = 0 : i64, scratch_operands = 0 : i64, tpu.core_type = #tpu.core_type<tc>, window_params = [{transform_indices = @transform_0, window_bounds = array<i64: 8, 128>}, {pipeline_mode = #tpu.pipeline_mode<synchronous>, transform_indices = @transform_1, window_bounds = array<i64: 128, 128>}, {pipeline_mode = #tpu.pipeline_mode<synchronous>, transform_indices = @transform_2, window_bounds = array<i64: 8, 128>}, {transform_indices = @transform_3, window_bounds = array<i64: 8, 128>}]} {
    %c0 = arith.constant 0 : index
    %c0_0 = arith.constant 0 : index
    %0 = vector.load %arg1[%c0, %c0_0] : memref<8x128xf32, #tpu.memory_space<vmem>>, vector<8x128xf32>
    %1 = arith.truncf %0 : vector<8x128xf32> to vector<8x128xbf16>
    %c0_1 = arith.constant 0 : index
    %c0_2 = arith.constant 0 : index
    %2 = vector.load %arg2[%c0_1, %c0_2] : memref<128x128xbf16, #tpu.memory_space<vmem>>, vector<128x128xbf16>
    %cst = arith.constant dense<0.000000e+00> : vector<8x128xf32>
    %3 = tpu.matmul %1, %2, %cst {dimension_numbers = #tpu.dot_dimension_numbers<[1], [0], [0], [1], [0, 0, 1, 1], [], []>} : vector<8x128xbf16>, vector<128x128xbf16>, vector<8x128xf32> -> vector<8x128xf32>
    %c0_3 = arith.constant 0 : index
    %c0_4 = arith.constant 0 : index
    %4 = vector.load %arg3[%c0_3, %c0_4] : memref<8x128xf32, #tpu.memory_space<vmem>>, vector<1x128xf32>
    %5 = vector.broadcast %4 : vector<1x128xf32> to vector<8x128xf32>
    %6 = arith.addf %3, %5 : vector<8x128xf32>
    %cst_5 = arith.constant dense<0.000000e+00> : vector<8xf32>
    %7 = vector.multi_reduction <add>, %6, %cst_5 [1] : vector<8x128xf32> to vector<8xf32>
    %8 = vector.shape_cast %7 : vector<8xf32> to vector<8x1xf32>
    %cst_6 = arith.constant 1.280000e+02 : f32
    %9 = vector.broadcast %cst_6 : f32 to vector<8x1xf32>
    %10 = arith.divf %8, %9 : vector<8x1xf32>
    %11 = vector.broadcast %10 : vector<8x1xf32> to vector<8x128xf32>
    %12 = arith.subf %6, %11 : vector<8x128xf32>
    %13 = arith.mulf %12, %12 : vector<8x128xf32>
    %cst_7 = arith.constant dense<0.000000e+00> : vector<8xf32>
    %14 = vector.multi_reduction <add>, %13, %cst_7 [1] : vector<8x128xf32> to vector<8xf32>
    %15 = vector.shape_cast %14 : vector<8xf32> to vector<8x1xf32>
    %cst_8 = arith.constant 1.280000e+02 : f32
    %16 = vector.broadcast %cst_8 : f32 to vector<8x1xf32>
    %17 = arith.divf %15, %16 : vector<8x1xf32>
    %cst_9 = arith.constant 9.99999974E-6 : f32
    %18 = vector.broadcast %cst_9 : f32 to vector<8x1xf32>
    %19 = arith.addf %17, %18 : vector<8x1xf32>
    %20 = math.rsqrt %19 : vector<8x1xf32>
    %21 = vector.broadcast %20 : vector<8x1xf32> to vector<8x128xf32>
    %22 = arith.mulf %12, %21 : vector<8x128xf32>
    %c1 = arith.constant 1 : index
    %c0_10 = arith.constant 0 : index
    %23 = vector.load %arg3[%c1, %c0_10] : memref<8x128xf32, #tpu.memory_space<vmem>>, vector<1x128xf32>
    %24 = vector.broadcast %23 : vector<1x128xf32> to vector<8x128xf32>
    %25 = arith.mulf %22, %24 : vector<8x128xf32>
    %c2 = arith.constant 2 : index
    %c0_11 = arith.constant 0 : index
    %26 = vector.load %arg3[%c2, %c0_11] : memref<8x128xf32, #tpu.memory_space<vmem>>, vector<1x128xf32>
    %27 = vector.broadcast %26 : vector<1x128xf32> to vector<8x128xf32>
    %28 = arith.addf %25, %27 : vector<8x128xf32>
    %cst_12 = arith.constant 0.000000e+00 : f32
    %29 = vector.broadcast %cst_12 : f32 to vector<8x128xf32>
    %30 = arith.maximumf %28, %29 : vector<8x128xf32>
    %c0_13 = arith.constant 0 : index
    %c0_14 = arith.constant 0 : index
    %31 = vector.load %arg4[%c0_13, %c0_14] : memref<8x128xf32, #tpu.memory_space<vmem>>, vector<8x128xf32>
    tpu.vector_store %arg4[%c0_13, %c0_14], %30 {strides = array<i32>} : memref<8x128xf32, #tpu.memory_space<vmem>>, vector<8x128xf32>,
    return
  }
  func.func @transform_0(%arg0: i32) -> (i32, i32) {
    %c0_i32 = arith.constant 0 : i32
    %c0_i32_0 = arith.constant 0 : i32
    return %arg0, %c0_i32 : i32, i32
  }
  func.func @transform_1(%arg0: i32) -> (i32, i32) {
    %c0_i32 = arith.constant 0 : i32
    %c0_i32_0 = arith.constant 0 : i32
    %c0_i32_1 = arith.constant 0 : i32
    return %c0_i32, %c0_i32_0 : i32, i32
  }
  func.func @transform_2(%arg0: i32) -> (i32, i32) {
    %c0_i32 = arith.constant 0 : i32
    %c0_i32_0 = arith.constant 0 : i32
    %c0_i32_1 = arith.constant 0 : i32
    return %c0_i32, %c0_i32_0 : i32, i32
  }
  func.func @transform_3(%arg0: i32) -> (i32, i32) {
    %c0_i32 = arith.constant 0 : i32
    %c0_i32_0 = arith.constant 0 : i32
    return %arg0, %c0_i32 : i32, i32
  }
}

</mosaic_0001>

<llo_original>
// kernel: tpu_custom_call.1
$region0: #{tpu_custom_call.1}
  #allocation0 [shape = 'u32[]', space=smem, size = 0x4, offset = 0x4, fixed_abs, tag = 'smem constant byte address 0x4 - core index']
  #allocation1 [shape = 'u32[144,128]{1,0:T(1,128)}', space=vmem, size = 0x12000, scoped, tag = 'internal scratch']
  %s0 = inlined_call_operand.hbm [shape: f32[16,128], index: 0, kind: input, shape index: {}]
  %s1 = inlined_call_operand.hbm [shape: bf16[128,128], index: 1, kind: input, shape index: {}]
  %s2 = inlined_call_operand.hbm [shape: f32[8,128], index: 2, kind: input, shape index: {}]
  %s3 = inlined_call_operand.hbm [shape: f32[16,128], index: 3, kind: output, shape index: {}]
  %s4 = sld [smem:[#allocation0]]
  $region57: #{tpu_custom_call.1} parent=0
    _
  %s6 = ssub.s32 1, %s4
  %s7 = scalar_select 0, %s6, %s4
  $region1: #{tpu_custom_call.1} parent=0
    #allocation2 [shape = 'u8[8192]{0}', space=vmem, size = 0x2000, scoped, tag = 'input window, operand 0']
    #allocation3 [shape = 's32[2]{0}', space=sflag, size = 0x8, scoped, tag = 'scoped memory for tpu_custom_call.1']
    #allocation4 [shape = 's32[2]{0}', space=sflag, size = 0x8, scoped, tag = 'scoped memory for tpu_custom_call.1']
    #allocation5 [shape = 'u8[32768]{0}', space=vmem, size = 0x8000, scoped, tag = 'input window, operand 1, single buffered']
    #allocation6 [shape = 's32[1]{0}', space=sflag, size = 0x4, scoped, tag = 'scoped memory for tpu_custom_call.1']
    #allocation7 [shape = 'u8[4096]{0}', space=vmem, size = 0x1000, scoped, tag = 'input window, operand 2, single buffered']
    #allocation8 [shape = 'u8[8192]{0}', space=vmem, size = 0x2000, scoped, tag = 'output window, operand 0']
    %8 = vsyncpa [#allocation3], 0
    %s9 = scalar_lea.sflag [#allocation3], 1
    %10 = vsyncpa %s9, 0
    %11 = vsyncpa [#allocation6], 0
    %12 = vsyncpa [#allocation4], 0
    %s13 = scalar_lea.sflag [#allocation4], 1
    %14 = vsyncpa %s13, 0
    loop: start=0, step=1, limit=4
    $region2: #{tpu_custom_call.1} parent=1 // loop_pre_header
      _
    $region3: #{tpu_custom_call.1} parent=1 // loop_header
      %s16 = sphi 0, %s20
      %p17 = scmp.ge.s32.totalorder %s16, 4
      %s26 = sphi 0, %s28
      %s29 = sphi 0, %s26
      %s30 = sphi 0, %s29
      %s46 = sphi 0, %s30
      %s50 = sphi 0, %s50
      %s52 = sphi 0, %s50
      %s53 = sphi 0, %s52
      %s67 = sphi 0, %s53
      %s71 = sphi 0, %s71
      %s73 = sphi 0, %s71
      %s74 = sphi 0, %s73
      %s88 = sphi 0, %s74
      %s94 = sphi 0, %s96
      %s97 = sphi 0, %s94
      %s98 = sphi 0, %s97
      %s114 = sphi 0, %s98
    $region4: #{tpu_custom_call.1} parent=1 // loop_header_branch
      %19 = sbr.rel (%p17) target = $region8
    $region5: #{tpu_custom_call.1} parent=1 // loop_body
      %s21 = ssub.s32 %s16, 1
      %s22 = ssub.s32 %s16, 2
      %s23 = sadd.s32 %s16, 1
      %s24 = ssub.s32 %s16, %s23
      %p25 = scmp.eq.s32.totalorder %s24, 0
      %s27 = sadd.s32 %s26, 1
      %s28 = scalar_select %p25, %s26, %s27
      %p31 = pneg %p25
      %p32 = scmp.eq.s32.totalorder %s16, 1
      %p33 = por %p31, %p32
      %p34 = scmp.ne.s32.totalorder %s26, %s29
      %p35 = scmp.eq.s32.totalorder %s16, 0
      %p36 = por %p34, %p35
      %p37 = scmp.ne.s32.totalorder %s26, %s29
      %p38 = scmp.eq.s32.totalorder %s21, 1
      %p39 = por %p37, %p38
      %p40 = scmp.ne.s32.totalorder %s29, %s30
      %p41 = scmp.eq.s32.totalorder %s21, 0
      %p42 = por %p40, %p41
      %p43 = scmp.ne.s32.totalorder %s29, %s30
      %p44 = scmp.eq.s32.totalorder %s22, 1
      %p45 = por %p43, %p44
      %p47 = scmp.ne.s32.totalorder %s30, %s46
      %p48 = scmp.eq.s32.totalorder %s22, 0
      %p49 = por %p47, %p48
      %s51 = sadd.s32 %s50, 1
      %p54 = scmp.eq.s32.totalorder %s16, 1
      %p55 = scmp.ne.s32.totalorder %s50, %s52
      %p56 = scmp.eq.s32.totalorder %s16, 0
      %p57 = por %p55, %p56
      %p58 = scmp.ne.s32.totalorder %s50, %s52
      %p59 = scmp.eq.s32.totalorder %s21, 1
      %p60 = por %p58, %p59
      %p61 = scmp.ne.s32.totalorder %s52, %s53
      %p62 = scmp.eq.s32.totalorder %s21, 0
      %p63 = por %p61, %p62
      %p64 = scmp.ne.s32.totalorder %s52, %s53
      %p65 = scmp.eq.s32.totalorder %s22, 1
      %p66 = por %p64, %p65
      %p68 = scmp.ne.s32.totalorder %s53, %s67
      %p69 = scmp.eq.s32.totalorder %s22, 0
      %p70 = por %p68, %p69
      %s72 = sadd.s32 %s71, 1
      %p75 = scmp.eq.s32.totalorder %s16, 1
      %p76 = scmp.ne.s32.totalorder %s71, %s73
      %p77 = scmp.eq.s32.totalorder %s16, 0
      %p78 = por %p76, %p77
      %p79 = scmp.ne.s32.totalorder %s71, %s73
      %p80 = scmp.eq.s32.totalorder %s21, 1
      %p81 = por %p79, %p80
      %p82 = scmp.ne.s32.totalorder %s73, %s74
      %p83 = scmp.eq.s32.totalorder %s21, 0
      %p84 = por %p82, %p83
      %p85 = scmp.ne.s32.totalorder %s73, %s74
      %p86 = scmp.eq.s32.totalorder %s22, 1
      %p87 = por %p85, %p86
      %p89 = scmp.ne.s32.totalorder %s74, %s88
      %p90 = scmp.eq.s32.totalorder %s22, 0
      %p91 = por %p89, %p90
      %s92 = ssub.s32 %s16, %s23
      %p93 = scmp.eq.s32.totalorder %s92, 0
      %s95 = sadd.s32 %s94, 1
      %s96 = scalar_select %p93, %s94, %s95
      %p99 = pneg %p93
      %p100 = scmp.eq.s32.totalorder %s16, 1
      %p101 = por %p99, %p100
      %p102 = scmp.ne.s32.totalorder %s94, %s97
      %p103 = scmp.eq.s32.totalorder %s16, 0
      %p104 = por %p102, %p103
      %p105 = scmp.ne.s32.totalorder %s94, %s97
      %p106 = scmp.eq.s32.totalorder %s21, 1
      %p107 = por %p105, %p106
      %p108 = scmp.ne.s32.totalorder %s97, %s98
      %p109 = scmp.eq.s32.totalorder %s21, 0
      %p110 = por %p108, %p109
      %p111 = scmp.ne.s32.totalorder %s97, %s98
      %p112 = scmp.eq.s32.totalorder %s22, 1
      %p113 = por %p111, %p112
      %p115 = scmp.ne.s32.totalorder %s98, %s114
      %p116 = scmp.eq.s32.totalorder %s22, 0
      %p117 = por %p115, %p116
      %p118 = scmp.le.s32.totalorder 1, %s16
      %p119 = scmp.lt.s32.totalorder %s16, 3
      %p120 = pnand %p118, %p119
      %p121 = pneg %p120
      // Predicated region
      $region9: #{tpu_custom_call.1} parent=5 // pred_check
        _
      $region10: #{tpu_custom_call.1} parent=5 // pred_check_branch
        %123 = sbr.rel (%p120) target = $region12
      $region11: #{tpu_custom_call.1} parent=5 // pred_region
        %s124 = ssub.s32 %s16, 1
        // Predicated region
        $region13: #{tpu_custom_call.1} parent=11 // pred_check
          %p125 = pneg %p63
        $region14: #{tpu_custom_call.1} parent=11 // pred_check_branch
          %127 = sbr.rel (%p125) target = $region16
        $region15: #{tpu_custom_call.1} parent=11 // pred_region
          %s129 = ssub.s32 1024, 1024
          %130 = vsyncadd [#allocation6], %s129
          %s131 = sshll.u32 [#allocation5], 4
          %s132 = int_to_ptr.vmem [resolvable:$true] %s131
          %137 = dma.hbm_to_vmem [thread:$0]  %s1, 1024, %s132, [#allocation6], 64, 64, 4
        $region16: #{tpu_custom_call.1} parent=11 // pred_fallthru
          _
        // Predicated region
        $region17: #{tpu_custom_call.1} parent=11 // pred_check
          %p138 = pneg %p84
        $region18: #{tpu_custom_call.1} parent=11 // pred_check_branch
          %140 = sbr.rel (%p138) target = $region20
        $region19: #{tpu_custom_call.1} parent=11 // pred_region
          %s142 = ssub.s32 128, 128
          %143 = vsyncadd [#allocation6], %s142
          %s145 = sshll.u32 [#allocation7], 4
          %s146 = int_to_ptr.vmem [resolvable:$true] %s145
          %148 = dma.hbm_to_vmem [thread:$0]  %s2, 128, %s146, [#allocation6]
        $region20: #{tpu_custom_call.1} parent=11 // pred_fallthru
          _
      $region12: #{tpu_custom_call.1} parent=5 // pred_fallthru
        _
      %p149 = scmp.lt.s32.totalorder %s16, 2
      // Predicated region
      $region21: #{tpu_custom_call.1} parent=5 // pred_check
        %p150 = pneg %p149
      $region22: #{tpu_custom_call.1} parent=5 // pred_check_branch
        %152 = sbr.rel (%p150) target = $region24
      $region23: #{tpu_custom_call.1} parent=5 // pred_region
        // Predicated region
        $region25: #{tpu_custom_call.1} parent=23 // pred_check
          %p153 = pneg %p36
        $region26: #{tpu_custom_call.1} parent=23 // pred_check_branch
          %155 = sbr.rel (%p153) target = $region28
        $region27: #{tpu_custom_call.1} parent=23 // pred_region
          %s156 = sand.u32 %s26, 1
          %s157 = scalar_lea.sflag [#allocation3], %s156
          %s158 = sand.u32 %s26, 1
          %s159 = smul.addr %s158, 8
          %s160 = scalar_lea.vmem [#allocation2], %s159
          %s162 = ssub.s32 128, 128
          %163 = vsyncadd %s157, %s162
          %s164 = smul.addr %s16, 128
          %s165 = scalar_lea.hbm %s0, %s164
          %s167 = sshll.u32 %s160, 4
          %s168 = int_to_ptr.vmem [resolvable:$true] %s167
          %170 = dma.hbm_to_vmem [thread:$0]  %s165, 128, %s168, %s157
        $region28: #{tpu_custom_call.1} parent=23 // pred_fallthru
          _
      $region24: #{tpu_custom_call.1} parent=5 // pred_fallthru
        _
      %p171 = scmp.le.s32.totalorder 1, %s16
      %p172 = scmp.lt.s32.totalorder %s16, 3
      %p173 = pnand %p171, %p172
      %p174 = pneg %p173
      // Predicated region
      $region29: #{tpu_custom_call.1} parent=5 // pred_check
        _
      $region30: #{tpu_custom_call.1} parent=5 // pred_check_branch
        %176 = sbr.rel (%p173) target = $region32
      $region31: #{tpu_custom_call.1} parent=5 // pred_region
        %s177 = ssub.s32 %s16, 1
        %s178 = sand.u32 %s29, 1
        %s179 = scalar_lea.sflag [#allocation3], %s178
        %s180 = sand.u32 %s29, 1
        %s181 = smul.addr %s180, 8
        %s182 = scalar_lea.vmem [#allocation2], %s181
        // Predicated region
        $region33: #{tpu_custom_call.1} parent=31 // pred_check
          %p183 = pneg %p42
        $region34: #{tpu_custom_call.1} parent=31 // pred_check_branch
          %185 = sbr.rel (%p183) target = $region36
        $region35: #{tpu_custom_call.1} parent=31 // pred_region
          %186 = dma.done %s179, 128
        $region36: #{tpu_custom_call.1} parent=31 // pred_fallthru
          _
        // Predicated region
        $region37: #{tpu_custom_call.1} parent=31 // pred_check
          %p187 = pneg %p63
        $region38: #{tpu_custom_call.1} parent=31 // pred_check_branch
          %189 = sbr.rel (%p187) target = $region40
        $region39: #{tpu_custom_call.1} parent=31 // pred_region
          %190 = dma.done [#allocation6], 1024
        $region40: #{tpu_custom_call.1} parent=31 // pred_fallthru
          _
        // Predicated region
        $region41: #{tpu_custom_call.1} parent=31 // pred_check
          %p191 = pneg %p84
        $region42: #{tpu_custom_call.1} parent=31 // pred_check_branch
          %193 = sbr.rel (%p191) target = $region44
        $region43: #{tpu_custom_call.1} parent=31 // pred_region
          %194 = dma.done [#allocation6], 128
        $region44: #{tpu_custom_call.1} parent=31 // pred_fallthru
          _
        %s195 = sand.u32 %s29, 1
        %s196 = scalar_lea.sflag [#allocation3], %s195
        %s197 = sand.u32 %s29, 1
        %s198 = smul.addr %s197, 8
        %s199 = scalar_lea.vmem [#allocation2], %s198
        %p200 = pneg %p42
        %p201 = pneg %p39
        %p202 = pneg %p63
        %p203 = pneg %p60
        %p204 = pneg %p84
        %p205 = pneg %p81
        %p206 = pneg %p110
        %p207 = pneg %p107
        %s208 = sand.u32 %s97, 1
        %s209 = scalar_lea.sflag [#allocation4], %s208
        %s210 = sand.u32 %s97, 1
        %s211 = smul.addr %s210, 8
        %s212 = scalar_lea.vmem [#allocation8], %s211
        %v214 = vld [vmem:[%s182] sm:$0xff]
        %v215 = vpack.c.bf16 %v214, %v214
        %v216 = vld [vmem:[#allocation5] sm:$0xf]
        %v217 = vld [vmem:[#allocation5 + $0x4] sm:$0xf]
        %v218 = vld [vmem:[#allocation5 + $0x8] sm:$0xf]
        %v219 = vld [vmem:[#allocation5 + $0xc] sm:$0xf]
        %v220 = vld [vmem:[#allocation5 + $0x10] sm:$0xf]
        %v221 = vld [vmem:[#allocation5 + $0x14] sm:$0xf]
        %v222 = vld [vmem:[#allocation5 + $0x18] sm:$0xf]
        %v223 = vld [vmem:[#allocation5 + $0x1c] sm:$0xf]
        %v224 = vld [vmem:[#allocation5 + $0x20] sm:$0xf]
        %v225 = vld [vmem:[#allocation5 + $0x24] sm:$0xf]
        %v226 = vld [vmem:[#allocation5 + $0x28] sm:$0xf]
        %v227 = vld [vmem:[#allocation5 + $0x2c] sm:$0xf]
        %v228 = vld [vmem:[#allocation5 + $0x30] sm:$0xf]
        %v229 = vld [vmem:[#allocation5 + $0x34] sm:$0xf]
        %v230 = vld [vmem:[#allocation5 + $0x38] sm:$0xf]
        %v231 = vld [vmem:[#allocation5 + $0x3c] sm:$0xf]
        %v232 = vld [vmem:[#allocation7] sm:$0x1]
        %v233 = vlaneseq
        %v234 = vshrl.u32 %v233, 7
        %v235 = vsub.s32 0, %v234
        %v236 = vrot.slane %v232, %v235
        %v253 = vunpack.c.l.b16 %v216
        %v254 = vunpack.c.l.b16 %v217
        %v255 = vunpack.c.l.b16 %v218
        %v256 = vunpack.c.l.b16 %v219
        %v257 = vunpack.c.l.b16 %v220
        %v258 = vunpack.c.l.b16 %v221
        %v259 = vunpack.c.l.b16 %v222
        %v260 = vunpack.c.l.b16 %v223
        %v261 = vunpack.c.l.b16 %v224
        %v262 = vunpack.c.l.b16 %v225
        %v263 = vunpack.c.l.b16 %v226
        %v264 = vunpack.c.l.b16 %v227
        %v265 = vunpack.c.l.b16 %v228
        %v266 = vunpack.c.l.b16 %v229
        %v267 = vunpack.c.l.b16 %v230
        %v268 = vunpack.c.l.b16 %v231
        %v269 = vpack.c.b16 %v254, %v253
        %v270 = vpack.c.b16 %v256, %v255
        %v271 = vpack.c.b16 %v258, %v257
        %v272 = vpack.c.b16 %v260, %v259
        %v273 = vpack.c.b16 %v262, %v261
        %v274 = vpack.c.b16 %v264, %v263
        %v275 = vpack.c.b16 %v266, %v265
        %v276 = vpack.c.b16 %v268, %v267
        %285 = vmatprep.subr.bf16.mxu0 0
        %286 = vmatpush1.bf16.msra.mxu0 %v276
        %287 = vmatprep.subr.bf16.mxu0 0
        %288 = vmatpush1.bf16.msra.mxu0 %v275
        %289 = vmatprep.subr.bf16.mxu0 0
        %290 = vmatpush1.bf16.msra.mxu0 %v274
        %291 = vmatprep.subr.bf16.mxu0 0
        %292 = vmatpush1.bf16.msra.mxu0 %v273
        %293 = vmatprep.subr.bf16.mxu0 0
        %294 = vmatpush1.bf16.msra.mxu0 %v272
        %295 = vmatprep.subr.bf16.mxu0 0
        %296 = vmatpush1.bf16.msra.mxu0 %v271
        %297 = vmatprep.subr.bf16.mxu0 0
        %298 = vmatpush1.bf16.msra.mxu0 %v270
        %299 = vmatprep.subr.bf16.mxu0 0
        %300 = vmatpush1.bf16.msra.mxu0 %v269
        %301 = vmatprep.subr.bf16.mxu0 0
        %302 = vmatpush2.bf16.msra.mxu0 0
        %303 = vmatprep.subr.bf16.mxu0 0
        %304 = vmatpush2.bf16.msra.mxu0 0
        %305 = vmatprep.subr.bf16.mxu0 0
        %306 = vmatpush2.bf16.msra.mxu0 0
        %307 = vmatprep.subr.bf16.mxu0 0
        %308 = vmatpush2.bf16.msra.mxu0 0
        %309 = vmatprep.subr.bf16.mxu0 0
        %310 = vmatpush2.bf16.msra.mxu0 0
        %311 = vmatprep.subr.bf16.mxu0 0
        %312 = vmatpush2.bf16.msra.mxu0 0
        %313 = vmatprep.subr.bf16.mxu0 0
        %314 = vmatpush2.bf16.msra.mxu0 0
        %315 = vmatprep.subr.bf16.mxu0 0
        %316 = vmatpush2.bf16.msra.mxu0 0
        %317 = vmatprep.mubr.bf16.mxu0 0
        %318 = vmatmul.mubr.bf16.gmra.mxu0 %v215
        %v319 = vpop.f32.mrf.mxu0
        %v320 = vadd.f32 %v236, %v319
        %v321 = vpop.f32.mrf.mxu0
        %v322 = vpop.f32.mrf.mxu0
        %v323 = vpop.f32.mrf.mxu0
        %324 = vdwg.mxu0
        %325 = vadd.xlane.f32.xlu0 %v320
        %v326 = vpop.xlane.xlu0 %325
        %v327 = vrcp.pop 128.0
        %v328 = vmul.f32 %v326, %v327
        %v329 = vsub.f32 %v320, %v328
        %v330 = vmul.f32 %v329, %v329
        %331 = vadd.xlane.f32.xlu0 %v330
        %v332 = vpop.xlane.xlu0 %331
        %v333 = vmul.f32 %v332, %v327
        %v334 = vadd.f32 %v333, 1e-05
        %v335 = vrsqrt.pop %v334
        %v336 = vmul.f32 %v329, %v335
        %v337 = vld [vmem:[#allocation7 + $0x1] sm:$0x1]
        %v338 = vlaneseq
        %v339 = vshrl.u32 %v338, 7
        %v340 = vsub.s32 0, %v339
        %v341 = vrot.slane %v337, %v340
        %v342 = vmul.f32 %v336, %v341
        %v343 = vld [vmem:[#allocation7 + $0x2] sm:$0x1]
        %v344 = vlaneseq
        %v345 = vshrl.u32 %v344, 7
        %v346 = vsub.s32 0, %v345
        %v347 = vrot.slane %v343, %v346
        %v348 = vadd.f32 %v342, %v347
        %v349 = vmax.f32 %v348, 0.0
        %350 = vst [vmem:[%s212] sm:$0xff] %v349
        %s351 = sand.u32 %s97, 1
        %s352 = scalar_lea.sflag [#allocation4], %s351
        %s353 = sand.u32 %s97, 1
        %s354 = smul.addr %s353, 8
        %s355 = scalar_lea.vmem [#allocation8], %s354
        // Predicated region
        $region45: #{tpu_custom_call.1} parent=31 // pred_check
          %p356 = pneg %p107
        $region46: #{tpu_custom_call.1} parent=31 // pred_check_branch
          %358 = sbr.rel (%p356) target = $region48
        $region47: #{tpu_custom_call.1} parent=31 // pred_region
          %s360 = ssub.s32 128, 128
          %361 = vsyncadd %s352, %s360
          %s362 = smul.addr %s21, 128
          %s363 = scalar_lea.hbm %s3, %s362
          %s365 = sshll.u32 %s355, 4
          %s366 = int_to_ptr.vmem [resolvable:$true] %s365
          %368 = dma.vmem_to_hbm [thread:$0]  %s366, 128, %s363, %s352
        $region48: #{tpu_custom_call.1} parent=31 // pred_fallthru
          _
      $region32: #{tpu_custom_call.1} parent=5 // pred_fallthru
        _
      %p369 = scmp.le.s32.totalorder 2, %s16
      // Predicated region
      $region49: #{tpu_custom_call.1} parent=5 // pred_check
        %p370 = pneg %p369
      $region50: #{tpu_custom_call.1} parent=5 // pred_check_branch
        %372 = sbr.rel (%p370) target = $region52
      $region51: #{tpu_custom_call.1} parent=5 // pred_region
        %s373 = ssub.s32 %s16, 2
        // Predicated region
        $region53: #{tpu_custom_call.1} parent=51 // pred_check
          %p374 = pneg %p113
        $region54: #{tpu_custom_call.1} parent=51 // pred_check_branch
          %376 = sbr.rel (%p374) target = $region56
        $region55: #{tpu_custom_call.1} parent=51 // pred_region
          %s377 = sand.u32 %s98, 1
          %s378 = scalar_lea.sflag [#allocation4], %s377
          %s379 = sand.u32 %s98, 1
          %s380 = smul.addr %s379, 8
          %s381 = scalar_lea.vmem [#allocation8], %s380
          %382 = dma.done %s378, 128
        $region56: #{tpu_custom_call.1} parent=51 // pred_fallthru
          _
      $region52: #{tpu_custom_call.1} parent=5 // pred_fallthru
        _
    $region6: #{tpu_custom_call.1} parent=1 // loop_footer
      %s20 = sadd.s32 1, %s16
    $region7: #{tpu_custom_call.1} parent=1 // loop_footer_branch
      %15 = sbr.rel target = $region3
    $region8: #{tpu_custom_call.1} parent=1 // loop_exit
      _
    %383 = vsyncpa [#allocation3], 1
    %s384 = scalar_lea.sflag [#allocation3], 1
    %385 = vsyncpa %s384, 1
    %386 = vsyncpa [#allocation6], 1
    %387 = vsyncpa [#allocation4], 1
    %s388 = scalar_lea.sflag [#allocation4], 1
    %389 = vsyncpa %s388, 1

// kernel: tpu_custom_call.1
$region0: #{tpu_custom_call.1}
  #allocation0 [shape = 'u32[]', space=smem, size = 0x4, offset = 0x4, fixed_abs, tag = 'smem constant byte address 0x4 - core index']
  #allocation1 [shape = 'u32[144,128]{1,0:T(1,128)}', space=vmem, size = 0x12000, scoped, tag = 'internal scratch']
  %s0 = inlined_call_operand.hbm [shape: f32[16,128], index: 0, kind: input, shape index: {}]
  %s1 = inlined_call_operand.hbm [shape: bf16[128,128], index: 1, kind: input, shape index: {}]
  %s2 = inlined_call_operand.hbm [shape: f32[8,128], index: 2, kind: input, shape index: {}]
  %s3 = inlined_call_operand.hbm [shape: f32[16,128], index: 3, kind: output, shape index: {}]
  %s4 = sld [smem:[#allocation0]]
  $region57: #{tpu_custom_call.1} parent=0
    _
  %s6 = ssub.s32 1, %s4
  %s7 = scalar_select 0, %s6, %s4
  $region1: #{tpu_custom_call.1} parent=0
    #allocation2 [shape = 'u8[8192]{0}', space=vmem, size = 0x2000, scoped, tag = 'input window, operand 0']
    #allocation3 [shape = 's32[2]{0}', space=sflag, size = 0x8, scoped, tag = 'scoped memory for tpu_custom_call.1']
    #allocation4 [shape = 's32[2]{0}', space=sflag, size = 0x8, scoped, tag = 'scoped memory for tpu_custom_call.1']
    #allocation5 [shape = 'u8[32768]{0}', space=vmem, size = 0x8000, scoped, tag = 'input window, operand 1, single buffered']
    #allocation6 [shape = 's32[1]{0}', space=sflag, size = 0x4, scoped, tag = 'scoped memory for tpu_custom_call.1']
    #allocation7 [shape = 'u8[4096]{0}', space=vmem, size = 0x1000, scoped, tag = 'input window, operand 2, single buffered']
    #allocation8 [shape = 'u8[8192]{0}', space=vmem, size = 0x2000, scoped, tag = 'output window, operand 0']
    %8 = vsyncpa [#allocation3], 0
    %s9 = scalar_lea.sflag [#allocation3], 1
    %10 = vsyncpa %s9, 0
    %11 = vsyncpa [#allocation6], 0
    %12 = vsyncpa [#allocation4], 0
    %s13 = scalar_lea.sflag [#allocation4], 1
    %14 = vsyncpa %s13, 0
    loop: start=0, step=1, limit=4
    $region2: #{tpu_custom_call.1} parent=1 // loop_pre_header
      _
    $region3: #{tpu_custom_call.1} parent=1 // loop_header
      %s16 = sphi 0, %s20
      %p17 = scmp.ge.s32.totalorder %s16, 4
      %s26 = sphi 0, %s28
      %s29 = sphi 0, %s26
      %s30 = sphi 0, %s29
      %s46 = sphi 0, %s30
      %s50 = sphi 0, %s50
      %s52 = sphi 0, %s50
      %s53 = sphi 0, %s52
      %s67 = sphi 0, %s53
      %s71 = sphi 0, %s71
      %s73 = sphi 0, %s71
      %s74 = sphi 0, %s73
      %s88 = sphi 0, %s74
      %s94 = sphi 0, %s96
      %s97 = sphi 0, %s94
      %s98 = sphi 0, %s97
      %s114 = sphi 0, %s98
    $region4: #{tpu_custom_call.1} parent=1 // loop_header_branch
      %19 = sbr.rel (%p17) target = $region8
    $region5: #{tpu_custom_call.1} parent=1 // loop_body
      %s21 = ssub.s32 %s16, 1
      %s22 = ssub.s32 %s16, 2
      %s23 = sadd.s32 %s16, 1
      %s24 = ssub.s32 %s16, %s23
      %p25 = scmp.eq.s32.totalorder %s24, 0
      %s27 = sadd.s32 %s26, 1
      %s28 = scalar_select %p25, %s26, %s27
      %p31 = pneg %p25
      %p32 = scmp.eq.s32.totalorder %s16, 1
      %p33 = por %p31, %p32
      %p34 = scmp.ne.s32.totalorder %s26, %s29
      %p35 = scmp.eq.s32.totalorder %s16, 0
      %p36 = por %p34, %p35
      %p37 = scmp.ne.s32.totalorder %s26, %s29
      %p38 = scmp.eq.s32.totalorder %s21, 1
      %p39 = por %p37, %p38
      %p40 = scmp.ne.s32.totalorder %s29, %s30
      %p41 = scmp.eq.s32.totalorder %s21, 0
      %p42 = por %p40, %p41
      %p43 = scmp.ne.s32.totalorder %s29, %s30
      %p44 = scmp.eq.s32.totalorder %s22, 1
      %p45 = por %p43, %p44
      %p47 = scmp.ne.s32.totalorder %s30, %s46
      %p48 = scmp.eq.s32.totalorder %s22, 0
      %p49 = por %p47, %p48
      %s51 = sadd.s32 %s50, 1
      %p54 = scmp.eq.s32.totalorder %s16, 1
      %p55 = scmp.ne.s32.totalorder %s50, %s52
      %p56 = scmp.eq.s32.totalorder %s16, 0
      %p57 = por %p55, %p56
      %p58 = scmp.ne.s32.totalorder %s50, %s52
      %p59 = scmp.eq.s32.totalorder %s21, 1
      %p60 = por %p58, %p59
      %p61 = scmp.ne.s32.totalorder %s52, %s53
      %p62 = scmp.eq.s32.totalorder %s21, 0
      %p63 = por %p61, %p62
      %p64 = scmp.ne.s32.totalorder %s52, %s53
      %p65 = scmp.eq.s32.totalorder %s22, 1
      %p66 = por %p64, %p65
      %p68 = scmp.ne.s32.totalorder %s53, %s67
      %p69 = scmp.eq.s32.totalorder %s22, 0
      %p70 = por %p68, %p69
      %s72 = sadd.s32 %s71, 1
      %p75 = scmp.eq.s32.totalorder %s16, 1
      %p76 = scmp.ne.s32.totalorder %s71, %s73
      %p77 = scmp.eq.s32.totalorder %s16, 0
      %p78 = por %p76, %p77
      %p79 = scmp.ne.s32.totalorder %s71, %s73
      %p80 = scmp.eq.s32.totalorder %s21, 1
      %p81 = por %p79, %p80
      %p82 = scmp.ne.s32.totalorder %s73, %s74
      %p83 = scmp.eq.s32.totalorder %s21, 0
      %p84 = por %p82, %p83
      %p85 = scmp.ne.s32.totalorder %s73, %s74
      %p86 = scmp.eq.s32.totalorder %s22, 1
      %p87 = por %p85, %p86
      %p89 = scmp.ne.s32.totalorder %s74, %s88
      %p90 = scmp.eq.s32.totalorder %s22, 0
      %p91 = por %p89, %p90
      %s92 = ssub.s32 %s16, %s23
      %p93 = scmp.eq.s32.totalorder %s92, 0
      %s95 = sadd.s32 %s94, 1
      %s96 = scalar_select %p93, %s94, %s95
      %p99 = pneg %p93
      %p100 = scmp.eq.s32.totalorder %s16, 1
      %p101 = por %p99, %p100
      %p102 = scmp.ne.s32.totalorder %s94, %s97
      %p103 = scmp.eq.s32.totalorder %s16, 0
      %p104 = por %p102, %p103
      %p105 = scmp.ne.s32.totalorder %s94, %s97
      %p106 = scmp.eq.s32.totalorder %s21, 1
      %p107 = por %p105, %p106
      %p108 = scmp.ne.s32.totalorder %s97, %s98
      %p109 = scmp.eq.s32.totalorder %s21, 0
      %p110 = por %p108, %p109
      %p111 = scmp.ne.s32.totalorder %s97, %s98
      %p112 = scmp.eq.s32.totalorder %s22, 1
      %p113 = por %p111, %p112
      %p115 = scmp.ne.s32.totalorder %s98, %s114
      %p116 = scmp.eq.s32.totalorder %s22, 0
      %p117 = por %p115, %p116
      %p118 = scmp.le.s32.totalorder 1, %s16
      %p119 = scmp.lt.s32.totalorder %s16, 3
      %p120 = pnand %p118, %p119
      %p121 = pneg %p120
      // Predicated region
      $region9: #{tpu_custom_call.1} parent=5 // pred_check
        _
      $region10: #{tpu_custom_call.1} parent=5 // pred_check_branch
        %123 = sbr.rel (%p120) target = $region12
      $region11: #{tpu_custom_call.1} parent=5 // pred_region
        %s124 = ssub.s32 %s16, 1
        // Predicated region
        $region13: #{tpu_custom_call.1} parent=11 // pred_check
          %p125 = pneg %p63
        $region14: #{tpu_custom_call.1} parent=11 // pred_check_branch
          %127 = sbr.rel (%p125) target = $region16
        $region15: #{tpu_custom_call.1} parent=11 // pred_region
          %s129 = ssub.s32 1024, 1024
          %130 = vsyncadd [#allocation6], %s129
          %s131 = sshll.u32 [#allocation5], 4
          %s132 = int_to_ptr.vmem [resolvable:$true] %s131
          %137 = dma.hbm_to_vmem [thread:$0]  %s1, 1024, %s132, [#allocation6], 64, 64, 4
        $region16: #{tpu_custom_call.1} parent=11 // pred_fallthru
          _
        // Predicated region
        $region17: #{tpu_custom_call.1} parent=11 // pred_check
          %p138 = pneg %p84
        $region18: #{tpu_custom_call.1} parent=11 // pred_check_branch
          %140 = sbr.rel (%p138) target = $region20
        $region19: #{tpu_custom_call.1} parent=11 // pred_region
          %s142 = ssub.s32 128, 128
          %143 = vsyncadd [#allocation6], %s142
          %s145 = sshll.u32 [#allocation7], 4
          %s146 = int_to_ptr.vmem [resolvable:$true] %s145
          %148 = dma.hbm_to_vmem [thread:$0]  %s2, 128, %s146, [#allocation6]
        $region20: #{tpu_custom_call.1} parent=11 // pred_fallthru
          _
      $region12: #{tpu_custom_call.1} parent=5 // pred_fallthru
        _
      %p149 = scmp.lt.s32.totalorder %s16, 2
      // Predicated region
      $region21: #{tpu_custom_call.1} parent=5 // pred_check
        %p150 = pneg %p149
      $region22: #{tpu_custom_call.1} parent=5 // pred_check_branch
        %152 = sbr.rel (%p150) target = $region24
      $region23: #{tpu_custom_call.1} parent=5 // pred_region
        // Predicated region
        $region25: #{tpu_custom_call.1} parent=23 // pred_check
          %p153 = pneg %p36
        $region26: #{tpu_custom_call.1} parent=23 // pred_check_branch
          %155 = sbr.rel (%p153) target = $region28
        $region27: #{tpu_custom_call.1} parent=23 // pred_region
          %s156 = sand.u32 %s26, 1
          %s157 = scalar_lea.sflag [#allocation3], %s156
          %s158 = sand.u32 %s26, 1
          %s159 = smul.addr %s158, 8
          %s160 = scalar_lea.vmem [#allocation2], %s159
          %s162 = ssub.s32 128, 128
          %163 = vsyncadd %s157, %s162
          %s164 = smul.addr %s16, 128
          %s165 = scalar_lea.hbm %s0, %s164
          %s167 = sshll.u32 %s160, 4
          %s168 = int_to_ptr.vmem [resolvable:$true] %s167
          %170 = dma.hbm_to_vmem [thread:$0]  %s165, 128, %s168, %s157
        $region28: #{tpu_custom_call.1} parent=23 // pred_fallthru
          _
      $region24: #{tpu_custom_call.1} parent=5 // pred_fallthru
        _
      %p171 = scmp.le.s32.totalorder 1, %s16
      %p172 = scmp.lt.s32.totalorder %s16, 3
      %p173 = pnand %p171, %p172
      %p174 = pneg %p173
      // Predicated region
      $region29: #{tpu_custom_call.1} parent=5 // pred_check
        _
      $region30: #{tpu_custom_call.1} parent=5 // pred_check_branch
        %176 = sbr.rel (%p173) target = $region32
      $region31: #{tpu_custom_call.1} parent=5 // pred_region
        %s177 = ssub.s32 %s16, 1
        %s178 = sand.u32 %s29, 1
        %s179 = scalar_lea.sflag [#allocation3], %s178
        %s180 = sand.u32 %s29, 1
        %s181 = smul.addr %s180, 8
        %s182 = scalar_lea.vmem [#allocation2], %s181
        // Predicated region
        $region33: #{tpu_custom_call.1} parent=31 // pred_check
          %p183 = pneg %p42
        $region34: #{tpu_custom_call.1} parent=31 // pred_check_branch
          %185 = sbr.rel (%p183) target = $region36
        $region35: #{tpu_custom_call.1} parent=31 // pred_region
          %186 = dma.done %s179, 128
        $region36: #{tpu_custom_call.1} parent=31 // pred_fallthru
          _
        // Predicated region
        $region37: #{tpu_custom_call.1} parent=31 // pred_check
          %p187 = pneg %p63
        $region38: #{tpu_custom_call.1} parent=31 // pred_check_branch
          %189 = sbr.rel (%p187) target = $region40
        $region39: #{tpu_custom_call.1} parent=31 // pred_region
          %190 = dma.done [#allocation6], 1024
        $region40: #{tpu_custom_call.1} parent=31 // pred_fallthru
          _
        // Predicated region
        $region41: #{tpu_custom_call.1} parent=31 // pred_check
          %p191 = pneg %p84
        $region42: #{tpu_custom_call.1} parent=31 // pred_check_branch
          %193 = sbr.rel (%p191) target = $region44
        $region43: #{tpu_custom_call.1} parent=31 // pred_region
          %194 = dma.done [#allocation6], 128
        $region44: #{tpu_custom_call.1} parent=31 // pred_fallthru
          _
        %s195 = sand.u32 %s29, 1
        %s196 = scalar_lea.sflag [#allocation3], %s195
        %s197 = sand.u32 %s29, 1
        %s198 = smul.addr %s197, 8
        %s199 = scalar_lea.vmem [#allocation2], %s198
        %p200 = pneg %p42
        %p201 = pneg %p39
        %p202 = pneg %p63
        %p203 = pneg %p60
        %p204 = pneg %p84
        %p205 = pneg %p81
        %p206 = pneg %p110
        %p207 = pneg %p107
        %s208 = sand.u32 %s97, 1
        %s209 = scalar_lea.sflag [#allocation4], %s208
        %s210 = sand.u32 %s97, 1
        %s211 = smul.addr %s210, 8
        %s212 = scalar_lea.vmem [#allocation8], %s211
        %v214 = vld [vmem:[%s182] sm:$0xff]
        %v215 = vpack.c.bf16 %v214, %v214
        %v216 = vld [vmem:[#allocation5] sm:$0xf]
        %v217 = vld [vmem:[#allocation5 + $0x4] sm:$0xf]
        %v218 = vld [vmem:[#allocation5 + $0x8] sm:$0xf]
        %v219 = vld [vmem:[#allocation5 + $0xc] sm:$0xf]
        %v220 = vld [vmem:[#allocation5 + $0x10] sm:$0xf]
        %v221 = vld [vmem:[#allocation5 + $0x14] sm:$0xf]
        %v222 = vld [vmem:[#allocation5 + $0x18] sm:$0xf]
        %v223 = vld [vmem:[#allocation5 + $0x1c] sm:$0xf]
        %v224 = vld [vmem:[#allocation5 + $0x20] sm:$0xf]
        %v225 = vld [vmem:[#allocation5 + $0x24] sm:$0xf]
        %v226 = vld [vmem:[#allocation5 + $0x28] sm:$0xf]
        %v227 = vld [vmem:[#allocation5 + $0x2c] sm:$0xf]
        %v228 = vld [vmem:[#allocation5 + $0x30] sm:$0xf]
        %v229 = vld [vmem:[#allocation5 + $0x34] sm:$0xf]
        %v230 = vld [vmem:[#allocation5 + $0x38] sm:$0xf]
        %v231 = vld [vmem:[#allocation5 + $0x3c] sm:$0xf]
        %v232 = vld [vmem:[#allocation7] sm:$0x1]
        %v233 = vlaneseq
        %v234 = vshrl.u32 %v233, 7
        %v235 = vsub.s32 0, %v234
        %v236 = vrot.slane %v232, %v235
        %v253 = vunpack.c.l.b16 %v216
        %v254 = vunpack.c.l.b16 %v217
        %v255 = vunpack.c.l.b16 %v218
        %v256 = vunpack.c.l.b16 %v219
        %v257 = vunpack.c.l.b16 %v220
        %v258 = vunpack.c.l.b16 %v221
        %v259 = vunpack.c.l.b16 %v222
        %v260 = vunpack.c.l.b16 %v223
        %v261 = vunpack.c.l.b16 %v224
        %v262 = vunpack.c.l.b16 %v225
        %v263 = vunpack.c.l.b16 %v226
        %v264 = vunpack.c.l.b16 %v227
        %v265 = vunpack.c.l.b16 %v228
        %v266 = vunpack.c.l.b16 %v229
        %v267 = vunpack.c.l.b16 %v230
        %v268 = vunpack.c.l.b16 %v231
        %v269 = vpack.c.b16 %v254, %v253
        %v270 = vpack.c.b16 %v256, %v255
        %v271 = vpack.c.b16 %v258, %v257
        %v272 = vpack.c.b16 %v260, %v259
        %v273 = vpack.c.b16 %v262, %v261
        %v274 = vpack.c.b16 %v264, %v263
        %v275 = vpack.c.b16 %v266, %v265
        %v276 = vpack.c.b16 %v268, %v267
        %285 = vmatprep.subr.bf16.mxu0 0
        %286 = vmatpush1.bf16.msra.mxu0 %v276
        %287 = vmatprep.subr.bf16.mxu0 0
        %288 = vmatpush1.bf16.msra.mxu0 %v275
        %289 = vmatprep.subr.bf16.mxu0 0
        %290 = vmatpush1.bf16.msra.mxu0 %v274
        %291 = vmatprep.subr.bf16.mxu0 0
        %292 = vmatpush1.bf16.msra.mxu0 %v273
        %293 = vmatprep.subr.bf16.mxu0 0
        %294 = vmatpush1.bf16.msra.mxu0 %v272
        %295 = vmatprep.subr.bf16.mxu0 0
        %296 = vmatpush1.bf16.msra.mxu0 %v271
        %297 = vmatprep.subr.bf16.mxu0 0
        %298 = vmatpush1.bf16.msra.mxu0 %v270
        %299 = vmatprep.subr.bf16.mxu0 0
        %300 = vmatpush1.bf16.msra.mxu0 %v269
        %301 = vmatprep.subr.bf16.mxu0 0
        %302 = vmatpush2.bf16.msra.mxu0 0
        %303 = vmatprep.subr.bf16.mxu0 0
        %304 = vmatpush2.bf16.msra.mxu0 0
        %305 = vmatprep.subr.bf16.mxu0 0
        %306 = vmatpush2.bf16.msra.mxu0 0
        %307 = vmatprep.subr.bf16.mxu0 0
        %308 = vmatpush2.bf16.msra.mxu0 0
        %309 = vmatprep.subr.bf16.mxu0 0
        %310 = vmatpush2.bf16.msra.mxu0 0
        %311 = vmatprep.subr.bf16.mxu0 0
        %312 = vmatpush2.bf16.msra.mxu0 0
        %313 = vmatprep.subr.bf16.mxu0 0
        %314 = vmatpush2.bf16.msra.mxu0 0
        %315 = vmatprep.subr.bf16.mxu0 0
        %316 = vmatpush2.bf16.msra.mxu0 0
        %317 = vmatprep.mubr.bf16.mxu0 0
        %318 = vmatmul.mubr.bf16.gmra.mxu0 %v215
        %v319 = vpop.f32.mrf.mxu0
        %v320 = vadd.f32 %v236, %v319
        %v321 = vpop.f32.mrf.mxu0
        %v322 = vpop.f32.mrf.mxu0
        %v323 = vpop.f32.mrf.mxu0
        %324 = vdwg.mxu0
        %325 = vadd.xlane.f32.xlu0 %v320
        %v326 = vpop.xlane.xlu0 %325
        %v327 = vrcp.pop 128.0
        %v328 = vmul.f32 %v326, %v327
        %v329 = vsub.f32 %v320, %v328
        %v330 = vmul.f32 %v329, %v329
        %331 = vadd.xlane.f32.xlu0 %v330
        %v332 = vpop.xlane.xlu0 %331
        %v333 = vmul.f32 %v332, %v327
        %v334 = vadd.f32 %v333, 1e-05
        %v335 = vrsqrt.pop %v334
        %v336 = vmul.f32 %v329, %v335
        %v337 = vld [vmem:[#allocation7 + $0x1] sm:$0x1]
        %v338 = vlaneseq
        %v339 = vshrl.u32 %v338, 7
        %v340 = vsub.s32 0, %v339
        %v341 = vrot.slane %v337, %v340
        %v342 = vmul.f32 %v336, %v341
        %v343 = vld [vmem:[#allocation7 + $0x2] sm:$0x1]
        %v344 = vlaneseq
        %v345 = vshrl.u32 %v344, 7
        %v346 = vsub.s32 0, %v345
        %v347 = vrot.slane %v343, %v346
        %v348 = vadd.f32 %v342, %v347
        %v349 = vmax.f32 %v348, 0.0
        %350 = vst [vmem:[%s212] sm:$0xff] %v349
        %s351 = sand.u32 %s97, 1
        %s352 = scalar_lea.sflag [#allocation4], %s351
        %s353 = sand.u32 %s97, 1
        %s354 = smul.addr %s353, 8
        %s355 = scalar_lea.vmem [#allocation8], %s354
        // Predicated region
        $region45: #{tpu_custom_call.1} parent=31 // pred_check
          %p356 = pneg %p107
        $region46: #{tpu_custom_call.1} parent=31 // pred_check_branch
          %358 = sbr.rel (%p356) target = $region48
        $region47: #{tpu_custom_call.1} parent=31 // pred_region
          %s360 = ssub.s32 128, 128
          %361 = vsyncadd %s352, %s360
          %s362 = smul.addr %s21, 128
          %s363 = scalar_lea.hbm %s3, %s362
          %s365 = sshll.u32 %s355, 4
          %s366 = int_to_ptr.vmem [resolvable:$true] %s365
          %368 = dma.vmem_to_hbm [thread:$0]  %s366, 128, %s363, %s352
        $region48: #{tpu_custom_call.1} parent=31 // pred_fallthru
          _
      $region32: #{tpu_custom_call.1} parent=5 // pred_fallthru
        _
      %p369 = scmp.le.s32.totalorder 2, %s16
      // Predicated region
      $region49: #{tpu_custom_call.1} parent=5 // pred_check
        %p370 = pneg %p369
      $region50: #{tpu_custom_call.1} parent=5 // pred_check_branch
        %372 = sbr.rel (%p370) target = $region52
      $region51: #{tpu_custom_call.1} parent=5 // pred_region
        %s373 = ssub.s32 %s16, 2
        // Predicated region
        $region53: #{tpu_custom_call.1} parent=51 // pred_check
          %p374 = pneg %p113
        $region54: #{tpu_custom_call.1} parent=51 // pred_check_branch
          %376 = sbr.rel (%p374) target = $region56
        $region55: #{tpu_custom_call.1} parent=51 // pred_region
          %s377 = sand.u32 %s98, 1
          %s378 = scalar_lea.sflag [#allocation4], %s377
          %s379 = sand.u32 %s98, 1
          %s380 = smul.addr %s379, 8
          %s381 = scalar_lea.vmem [#allocation8], %s380
          %382 = dma.done %s378, 128
        $region56: #{tpu_custom_call.1} parent=51 // pred_fallthru
          _
      $region52: #{tpu_custom_call.1} parent=5 // pred_fallthru
        _
    $region6: #{tpu_custom_call.1} parent=1 // loop_footer
      %s20 = sadd.s32 1, %s16
    $region7: #{tpu_custom_call.1} parent=1 // loop_footer_branch
      %15 = sbr.rel target = $region3
    $region8: #{tpu_custom_call.1} parent=1 // loop_exit
      _
    %383 = vsyncpa [#allocation3], 1
    %s384 = scalar_lea.sflag [#allocation3], 1
    %385 = vsyncpa %s384, 1
    %386 = vsyncpa [#allocation6], 1
    %387 = vsyncpa [#allocation4], 1
    %s388 = scalar_lea.sflag [#allocation4], 1
    %389 = vsyncpa %s388, 1

</llo_original>
